<compile_context>
chip_gen: v7x
topology: tpu7x:2x2x1
jax: 0.10.0
libtpu: 0.0.40
codegen_flags: <defaults>
</compile_context>

<pallas_src>
import jax
import jax.numpy as jnp
from jax.experimental import pallas as pl
from jax.experimental.pallas import tpu as pltpu


def _round_up(n, m):
    return ((n + m - 1) // m) * m


def highway_kernel(x_ref, w_ref, b_ref, o_ref):
    # x_ref: (tm, L) packed rows; each lane-row holds two logical rows of width E.
    x = x_ref[...]
    L = x.shape[-1]
    # Single fused block-diagonal matmul: cols [0, L) -> proj (both packed rows),
    # cols [L, 2L) -> gate (both packed rows); lane-aligned with packed x.
    fused = jnp.dot(x, w_ref[...], preferred_element_type=jnp.float32)
    fused = fused + b_ref[...]                      # bias broadcast once
    proj = jnp.maximum(fused[:, :L], 0.0)           # relu  (vreg-boundary slice)
    gate = jax.nn.sigmoid(fused[:, L:])             # sigmoid (EUP)
    x32 = x.astype(jnp.float32)
    # gate*proj + (1-gate)*x  ==  gate*(proj - x) + x
    o_ref[...] = (gate * (proj - x32) + x32).astype(o_ref.dtype)


def fuse_highway_params(w_proj, b_proj, w_gate, b_gate):
    """Build the packed block-diagonal fused weight/bias ONCE at init time.

    w_*: PyTorch-style (E_out, E_in); b_*: (E,).
    Returns w_big (2E, 4E), b_big (1, 4E) so that for packed input rows
    [row_even | row_odd] (2E lanes):
      fused[:,   0:E ] = proj(row_even)     fused[:,  E:2E] = proj(row_odd)
      fused[:, 2E:3E ] = gate(row_even)     fused[:, 3E:4E] = gate(row_odd)
    """
    E = w_proj.shape[0]
    wp = w_proj.T.astype(jnp.float32)
    wg = w_gate.T.astype(jnp.float32)
    z = jnp.zeros((E, E), jnp.float32)
    top = jnp.concatenate([wp, z, wg, z], axis=1)          # acts on lanes [0, E)
    bot = jnp.concatenate([z, wp, z, wg], axis=1)          # acts on lanes [E, 2E)
    w_big = jnp.concatenate([top, bot], axis=0)            # (2E, 4E)
    b_big = jnp.concatenate([b_proj, b_proj, b_gate, b_gate]).astype(jnp.float32)
    return w_big, b_big.reshape(1, 4 * E)


def highway_fused(x, w_big, b_big, *, tm_max=2048):
    """x: (N, E) float32; (w_big, b_big) from fuse_highway_params."""
    N, E = x.shape
    L = 2 * E

    # Pack two logical rows per lane-row: (N, E) -> (N/2, 2E).  For E=64 every
    # kernel array is 128-lane dense.  Reshape is a free metadata change; only
    # odd N costs an at-most-one-row pad.
    n_even = _round_up(N, 2)
    x_in = x if n_even == N else jnp.pad(x, ((0, n_even - N), (0, 0)))
    n_packed = n_even // 2
    xp = x_in.reshape(n_packed, L)

    # Big row tile (amortizes ~0.35us/step pipeline overhead), multiple of 8,
    # capped so the parallel grid keeps >= 2 steps for v7x megacore when the
    # problem allows it.  Partial tail block is handled (masked) by Pallas.
    tm = min(tm_max, max(8, _round_up(pl.cdiv(n_packed, 2), 8)))
    grid = (pl.cdiv(n_packed, tm),)

    cost = pl.CostEstimate(
        flops=2 * n_packed * L * (2 * L),
        transcendentals=n_even * E,                 # sigmoid
        bytes_accessed=4 * (2 * n_even * E + int(w_big.size) + int(b_big.size)),
    )

    out = pl.pallas_call(
        highway_kernel,
        out_shape=jax.ShapeDtypeStruct((n_packed, L), x.dtype),
        grid_spec=pltpu.PrefetchScalarGridSpec(
            num_scalar_prefetch=0,
            grid=grid,
            in_specs=[
                pl.BlockSpec((tm, L), lambda i: (i, 0)),        # packed x tile
                pl.BlockSpec((L, 2 * L), lambda i: (0, 0)),     # resident fused weight
                pl.BlockSpec((1, 2 * L), lambda i: (0, 0)),     # resident fused bias
            ],
            out_specs=pl.BlockSpec((tm, L), lambda i: (i, 0)),  # 128-lane-dense store
        ),
        compiler_params=pltpu.CompilerParams(
            dimension_semantics=("parallel",)),
        cost_estimate=cost,
    )(xp, w_big, b_big)

    out = out.reshape(n_even, E)
    return out if n_even == N else out[:N]


def highway(x, w_proj, b_proj, w_gate, b_gate, *, tm_max=2048):
    """Convenience wrapper; prefer fusing params once at init (fuse_highway_params)."""
    w_big, b_big = fuse_highway_params(w_proj, b_proj, w_gate, b_gate)
    return highway_fused(x, w_big, b_big, tm_max=tm_max)


def highway_ref(x, w_proj, b_proj, w_gate, b_gate):
    proj = jax.nn.relu(x @ w_proj.T + b_proj)
    gate = jax.nn.sigmoid(x @ w_gate.T + b_gate)
    return gate * proj + (1.0 - gate) * x


if __name__ == "__main__":
    word_embed_size = 64   # E
    batch = 16             # N (e.g. batch_size * num_words flattened)

    key = jax.random.PRNGKey(0)
    k_x, k_wp, k_bp, k_wg, k_bg = jax.random.split(key, 5)

    x = jax.random.normal(k_x, (batch, word_embed_size), dtype=jnp.float32)
    scale = 1.0 / jnp.sqrt(word_embed_size)
    w_proj = jax.random.uniform(k_wp, (word_embed_size, word_embed_size),
                                minval=-scale, maxval=scale, dtype=jnp.float32)
    b_proj = jax.random.uniform(k_bp, (word_embed_size,),
                                minval=-scale, maxval=scale, dtype=jnp.float32)
    w_gate = jax.random.uniform(k_wg, (word_embed_size, word_embed_size),
                                minval=-scale, maxval=scale, dtype=jnp.float32)
    b_gate = jax.random.uniform(k_bg, (word_embed_size,),
                                minval=-scale, maxval=scale, dtype=jnp.float32)

    # Fuse parameters once (init-time), reuse for every forward call.
    w_big, b_big = fuse_highway_params(w_proj, b_proj, w_gate, b_gate)

    out = highway_fused(x, w_big, b_big)
    out = jax.block_until_ready(out)
    ref = highway_ref(x, w_proj, b_proj, w_gate, b_gate)
    assert jnp.allclose(out, ref, atol=1e-5, rtol=1e-5), "mismatch vs reference"

    # Also exercise odd N / partial tail block path.
    x2 = jax.random.normal(jax.random.PRNGKey(1), (23, word_embed_size), dtype=jnp.float32)
    out2 = jax.block_until_ready(highway_fused(x2, w_big, b_big))
    ref2 = highway_ref(x2, w_proj, b_proj, w_gate, b_gate)
    assert jnp.allclose(out2, ref2, atol=1e-5, rtol=1e-5), "mismatch vs reference (odd N)"

    print("KERNEL_OK")
</pallas_src>

<mosaic_0001>
module attributes {stable_mosaic.version = 11 : i64} {
  func.func @highway_kernel(%arg0: i32, %arg1: memref<8x128xf32, #tpu.memory_space<vmem>>, %arg2: memref<128x256xf32, #tpu.memory_space<vmem>>, %arg3: memref<1x256xf32, #tpu.memory_space<vmem>>, %arg4: memref<8x128xf32, #tpu.memory_space<vmem>>) attributes {dimension_semantics = [#tpu.dimension_semantics<parallel>], iteration_bounds = array<i64: 1>, scalar_prefetch = 0 : i64, scratch_operands = 0 : i64, tpu.core_type = #tpu.core_type<tc>, window_params = [{transform_indices = @transform_0, window_bounds = array<i64: 8, 128>}, {pipeline_mode = #tpu.pipeline_mode<synchronous>, transform_indices = @transform_1, window_bounds = array<i64: 128, 256>}, {pipeline_mode = #tpu.pipeline_mode<synchronous>, transform_indices = @transform_2, window_bounds = array<i64: 1, 256>}, {transform_indices = @transform_3, window_bounds = array<i64: 8, 128>}]} {
    %c0 = arith.constant 0 : index
    %c0_0 = arith.constant 0 : index
    %0 = vector.load %arg1[%c0, %c0_0] : memref<8x128xf32, #tpu.memory_space<vmem>>, vector<8x128xf32>
    %c0_1 = arith.constant 0 : index
    %c0_2 = arith.constant 0 : index
    %1 = vector.load %arg2[%c0_1, %c0_2] : memref<128x256xf32, #tpu.memory_space<vmem>>, vector<128x256xf32>
    %cst = arith.constant dense<0.000000e+00> : vector<8x256xf32>
    %2 = tpu.matmul %0, %1, %cst {dimension_numbers = #tpu.dot_dimension_numbers<[1], [0], [0], [1], [0, 0, 1, 1], [], []>} : vector<8x128xf32>, vector<128x256xf32>, vector<8x256xf32> -> vector<8x256xf32>
    %c0_3 = arith.constant 0 : index
    %c0_4 = arith.constant 0 : index
    %3 = vector.load %arg3[%c0_3, %c0_4] : memref<1x256xf32, #tpu.memory_space<vmem>>, vector<1x256xf32>
    %4 = vector.broadcast %3 : vector<1x256xf32> to vector<8x256xf32>
    %5 = arith.addf %2, %4 : vector<8x256xf32>
    %6 = vector.extract_strided_slice %5 {offsets = [0, 0], sizes = [8, 128], strides = [1, 1]} : vector<8x256xf32> to vector<8x128xf32>
    %cst_5 = arith.constant 0.000000e+00 : f32
    %7 = vector.broadcast %cst_5 : f32 to vector<8x128xf32>
    %8 = arith.maximumf %6, %7 : vector<8x128xf32>
    %9 = vector.extract_strided_slice %5 {offsets = [0, 128], sizes = [8, 128], strides = [1, 1]} : vector<8x256xf32> to vector<8x128xf32>
    %10 = arith.negf %9 : vector<8x128xf32>
    %11 = math.exp %10 : vector<8x128xf32>
    %cst_6 = arith.constant 1.000000e+00 : f32
    %12 = vector.broadcast %cst_6 : f32 to vector<8x128xf32>
    %13 = arith.addf %12, %11 : vector<8x128xf32>
    %14 = arith.divf %12, %13 : vector<8x128xf32>
    %15 = arith.subf %8, %0 : vector<8x128xf32>
    %16 = arith.mulf %14, %15 : vector<8x128xf32>
    %17 = arith.addf %16, %0 : vector<8x128xf32>
    %c0_7 = arith.constant 0 : index
    %c0_8 = arith.constant 0 : index
    %18 = vector.load %arg4[%c0_7, %c0_8] : memref<8x128xf32, #tpu.memory_space<vmem>>, vector<8x128xf32>
    tpu.vector_store %arg4[%c0_7, %c0_8], %17 {strides = array<i32>} : memref<8x128xf32, #tpu.memory_space<vmem>>, vector<8x128xf32>,
    return
  }
  func.func @transform_0(%arg0: i32) -> (i32, i32) {
    %c0_i32 = arith.constant 0 : i32
    %c0_i32_0 = arith.constant 0 : i32
    return %arg0, %c0_i32 : i32, i32
  }
  func.func @transform_1(%arg0: i32) -> (i32, i32) {
    %c0_i32 = arith.constant 0 : i32
    %c0_i32_0 = arith.constant 0 : i32
    %c0_i32_1 = arith.constant 0 : i32
    return %c0_i32, %c0_i32_0 : i32, i32
  }
  func.func @transform_2(%arg0: i32) -> (i32, i32) {
    %c0_i32 = arith.constant 0 : i32
    %c0_i32_0 = arith.constant 0 : i32
    %c0_i32_1 = arith.constant 0 : i32
    return %c0_i32, %c0_i32_0 : i32, i32
  }
  func.func @transform_3(%arg0: i32) -> (i32, i32) {
    %c0_i32 = arith.constant 0 : i32
    %c0_i32_0 = arith.constant 0 : i32
    return %arg0, %c0_i32 : i32, i32
  }
}

</mosaic_0001>

<llo_original>
// kernel: tpu_custom_call.1
$region0: #{tpu_custom_call.1}
  #allocation0 [shape = 'u32[]', space=smem, size = 0x4, offset = 0x4, fixed_abs, tag = 'smem constant byte address 0x4 - core index']
  #allocation1 [shape = 'u32[144,128]{1,0:T(1,128)}', space=vmem, size = 0x12000, scoped, tag = 'internal scratch']
  %s0 = inlined_call_operand.hbm [shape: f32[8,128], index: 0, kind: input, shape index: {}]
  %s1 = inlined_call_operand.hbm [shape: f32[128,256], index: 1, kind: input, shape index: {}]
  %s2 = inlined_call_operand.vmem [shape: f32[1,256], index: 2, kind: input, shape index: {}]
  %s3 = inlined_call_operand.hbm [shape: f32[8,128], index: 3, kind: output, shape index: {}]
  %s4 = sld [smem:[#allocation0]]
  $region30: #{tpu_custom_call.1} parent=0
    _
  %s6 = ssub.s32 1, %s4
  %s7 = scalar_select 0, %s6, %s4
  $region1: #{tpu_custom_call.1} parent=0
    #allocation2 [shape = 'u8[4096]{0}', space=vmem, size = 0x1000, scoped, tag = 'input window, operand 0, single buffered']
    #allocation3 [shape = 's32[1]{0}', space=sflag, size = 0x4, scoped, tag = 'scoped memory for tpu_custom_call.1']
    #allocation4 [shape = 's32[1]{0}', space=sflag, size = 0x4, scoped, tag = 'scoped memory for tpu_custom_call.1']
    #allocation5 [shape = 'u8[131072]{0}', space=vmem, size = 0x20000, scoped, tag = 'input window, operand 1, single buffered']
    #allocation6 [shape = 's32[1]{0}', space=sflag, size = 0x4, scoped, tag = 'scoped memory for tpu_custom_call.1']
    #allocation7 [shape = 'u8[4096]{0}', space=vmem, size = 0x1000, scoped, tag = 'output window, operand 0, single buffered']
    %8 = vsyncpa [#allocation3], 0
    %9 = vsyncpa [#allocation6], 0
    %10 = vsyncpa [#allocation4], 0
    // Predicated region
    $region2: #{tpu_custom_call.1} parent=1 // pred_check
      _
    $region3: #{tpu_custom_call.1} parent=1 // pred_check_branch
      %12 = sbr.rel (0) target = $region5
    $region4: #{tpu_custom_call.1} parent=1 // pred_region
      %s14 = ssub.s32 128, 128
      %15 = vsyncadd [#allocation3], %s14
      %s17 = sshll.u32 [#allocation2], 4
      %s18 = int_to_ptr.vmem [resolvable:$true] %s17
      %20 = dma.hbm_to_vmem [thread:$0]  %s0, 128, %s18, [#allocation3]
    $region5: #{tpu_custom_call.1} parent=1 // pred_fallthru
      _
    // Predicated region
    $region6: #{tpu_custom_call.1} parent=1 // pred_check
      _
    $region7: #{tpu_custom_call.1} parent=1 // pred_check_branch
      %22 = sbr.rel (0) target = $region9
    $region8: #{tpu_custom_call.1} parent=1 // pred_region
      %s24 = ssub.s32 4096, 4096
      %25 = vsyncadd [#allocation6], %s24
      %s26 = sshll.u32 [#allocation5], 4
      %s27 = int_to_ptr.vmem [resolvable:$true] %s26
      %32 = dma.hbm_to_vmem [thread:$0]  %s1, 4096, %s27, [#allocation6], 256, 256, 16
    $region9: #{tpu_custom_call.1} parent=1 // pred_fallthru
      _
    // Predicated region
    $region10: #{tpu_custom_call.1} parent=1 // pred_check
      _
    $region11: #{tpu_custom_call.1} parent=1 // pred_check_branch
      %34 = sbr.rel (0) target = $region13
    $region12: #{tpu_custom_call.1} parent=1 // pred_region
      _
    $region13: #{tpu_custom_call.1} parent=1 // pred_fallthru
      _
    // Predicated region
    $region14: #{tpu_custom_call.1} parent=1 // pred_check
      _
    $region15: #{tpu_custom_call.1} parent=1 // pred_check_branch
      %36 = sbr.rel (0) target = $region17
    $region16: #{tpu_custom_call.1} parent=1 // pred_region
      %37 = dma.done [#allocation3], 128
    $region17: #{tpu_custom_call.1} parent=1 // pred_fallthru
      _
    // Predicated region
    $region18: #{tpu_custom_call.1} parent=1 // pred_check
      _
    $region19: #{tpu_custom_call.1} parent=1 // pred_check_branch
      %39 = sbr.rel (0) target = $region21
    $region20: #{tpu_custom_call.1} parent=1 // pred_region
      %40 = dma.done [#allocation6], 4096
    $region21: #{tpu_custom_call.1} parent=1 // pred_fallthru
      _
    %v41 = vld [vmem:[#allocation2] sm:$0xff]
    %v42 = vld [vmem:[#allocation5] sm:$0xff]
    %v43 = vld [vmem:[#allocation5 + $0x8] sm:$0xff]
    %v44 = vld [vmem:[#allocation5 + $0x10] sm:$0xff]
    %v45 = vld [vmem:[#allocation5 + $0x18] sm:$0xff]
    %v46 = vld [vmem:[#allocation5 + $0x20] sm:$0xff]
    %v47 = vld [vmem:[#allocation5 + $0x28] sm:$0xff]
    %v48 = vld [vmem:[#allocation5 + $0x30] sm:$0xff]
    %v49 = vld [vmem:[#allocation5 + $0x38] sm:$0xff]
    %v50 = vld [vmem:[#allocation5 + $0x40] sm:$0xff]
    %v51 = vld [vmem:[#allocation5 + $0x48] sm:$0xff]
    %v52 = vld [vmem:[#allocation5 + $0x50] sm:$0xff]
    %v53 = vld [vmem:[#allocation5 + $0x58] sm:$0xff]
    %v54 = vld [vmem:[#allocation5 + $0x60] sm:$0xff]
    %v55 = vld [vmem:[#allocation5 + $0x68] sm:$0xff]
    %v56 = vld [vmem:[#allocation5 + $0x70] sm:$0xff]
    %v57 = vld [vmem:[#allocation5 + $0x78] sm:$0xff]
    %v58 = vld [vmem:[#allocation5 + $0x80] sm:$0xff]
    %v59 = vld [vmem:[#allocation5 + $0x88] sm:$0xff]
    %v60 = vld [vmem:[#allocation5 + $0x90] sm:$0xff]
    %v61 = vld [vmem:[#allocation5 + $0x98] sm:$0xff]
    %v62 = vld [vmem:[#allocation5 + $0xa0] sm:$0xff]
    %v63 = vld [vmem:[#allocation5 + $0xa8] sm:$0xff]
    %v64 = vld [vmem:[#allocation5 + $0xb0] sm:$0xff]
    %v65 = vld [vmem:[#allocation5 + $0xb8] sm:$0xff]
    %v66 = vld [vmem:[#allocation5 + $0xc0] sm:$0xff]
    %v67 = vld [vmem:[#allocation5 + $0xc8] sm:$0xff]
    %v68 = vld [vmem:[#allocation5 + $0xd0] sm:$0xff]
    %v69 = vld [vmem:[#allocation5 + $0xd8] sm:$0xff]
    %v70 = vld [vmem:[#allocation5 + $0xe0] sm:$0xff]
    %v71 = vld [vmem:[#allocation5 + $0xe8] sm:$0xff]
    %v72 = vld [vmem:[#allocation5 + $0xf0] sm:$0xff]
    %v73 = vld [vmem:[#allocation5 + $0xf8] sm:$0xff]
    %v74 = vld [vmem:[%s2] sm:$0x3]
    %v76 = vlaneseq
    %v77 = vshrl.u32 %v76, 7
    %v78 = vsub.s32 0, %v77
    %v79 = vrot.slane %v74, %v78
    %v80 = vlaneseq
    %v81 = vshrl.u32 %v80, 7
    %v82 = vsub.s32 1, %v81
    %v83 = vrot.slane %v74, %v82
    %86 = vmatprep.subr.mxu0 %v43
    %87 = vmatpush1.msra.mxu0 %v42
    %88 = vmatprep.subr.mxu0 %v45
    %89 = vmatpush1.msra.mxu0 %v44
    %90 = vmatprep.subr.mxu0 %v47
    %91 = vmatpush1.msra.mxu0 %v46
    %92 = vmatprep.subr.mxu0 %v49
    %93 = vmatpush1.msra.mxu0 %v48
    %94 = vmatprep.subr.mxu0 %v51
    %95 = vmatpush1.msra.mxu0 %v50
    %96 = vmatprep.subr.mxu0 %v53
    %97 = vmatpush1.msra.mxu0 %v52
    %98 = vmatprep.subr.mxu0 %v55
    %99 = vmatpush1.msra.mxu0 %v54
    %100 = vmatprep.subr.mxu0 %v57
    %101 = vmatpush1.msra.mxu0 %v56
    %102 = vmatprep.subr.mxu0 %v59
    %103 = vmatpush1.msra.mxu0 %v58
    %104 = vmatprep.subr.mxu0 %v61
    %105 = vmatpush1.msra.mxu0 %v60
    %106 = vmatprep.subr.mxu0 %v63
    %107 = vmatpush1.msra.mxu0 %v62
    %108 = vmatprep.subr.mxu0 %v65
    %109 = vmatpush1.msra.mxu0 %v64
    %110 = vmatprep.subr.mxu0 %v67
    %111 = vmatpush1.msra.mxu0 %v66
    %112 = vmatprep.subr.mxu0 %v69
    %113 = vmatpush1.msra.mxu0 %v68
    %114 = vmatprep.subr.mxu0 %v71
    %115 = vmatpush1.msra.mxu0 %v70
    %116 = vmatprep.subr.mxu0 %v73
    %117 = vmatpush1.msra.mxu0 %v72
    %118 = vmatprep.subr.mxu0 0.0
    %119 = vmatpush1.msra.mxu0 0.0
    %120 = vmatprep.subr.mxu0 0.0
    %121 = vmatpush1.msra.mxu0 0.0
    %122 = vmatprep.subr.mxu0 0.0
    %123 = vmatpush1.msra.mxu0 0.0
    %124 = vmatprep.subr.mxu0 0.0
    %125 = vmatpush1.msra.mxu0 0.0
    %126 = vmatprep.subr.mxu0 0.0
    %127 = vmatpush1.msra.mxu0 0.0
    %128 = vmatprep.subr.mxu0 0.0
    %129 = vmatpush1.msra.mxu0 0.0
    %130 = vmatprep.subr.mxu0 0.0
    %131 = vmatpush1.msra.mxu0 0.0
    %132 = vmatprep.subr.mxu0 0.0
    %133 = vmatpush1.msra.mxu0 0.0
    %134 = vmatprep.subr.mxu0 0.0
    %135 = vmatpush1.msra.mxu0 0.0
    %136 = vmatprep.subr.mxu0 0.0
    %137 = vmatpush1.msra.mxu0 0.0
    %138 = vmatprep.subr.mxu0 0.0
    %139 = vmatpush1.msra.mxu0 0.0
    %140 = vmatprep.subr.mxu0 0.0
    %141 = vmatpush1.msra.mxu0 0.0
    %142 = vmatprep.subr.mxu0 0.0
    %143 = vmatpush1.msra.mxu0 0.0
    %144 = vmatprep.subr.mxu0 0.0
    %145 = vmatpush1.msra.mxu0 0.0
    %146 = vmatprep.subr.mxu0 0.0
    %147 = vmatpush1.msra.mxu0 0.0
    %148 = vmatprep.subr.mxu0 0.0
    %149 = vmatpush1.msra.mxu0 0.0
    %150 = vmatprep.mubr.f32.mxu0 0.0
    %151 = vmatmul.mubr.f32.gmra.mrb[0].mxu0 %v41
    %v152 = vpop.f32.mrb[0].mxu0
    %v153 = vadd.f32 %v79, %v152
    %v154 = vpop.f32.mrb[0].mxu0
    %v155 = vadd.f32 %v83, %v154
    %156 = vdwg.mxu0
    %v157 = vmax.f32 %v153, 0.0
    %v158 = vxor.u32 %v155, 2147483648
    %v159 = vmul.f32 %v158, 1.442695
    %v160 = vpow.pop %v159
    %v161 = vadd.f32 %v160, 1.0
    %v162 = vrcp.pop %v161
    %v163 = vmul.f32 1.0, %v162
    %v164 = vsub.f32 %v157, %v41
    %v165 = vmul.f32 %v163, %v164
    %v166 = vadd.f32 %v165, %v41
    %167 = vst [vmem:[#allocation7] sm:$0xff] %v166
    // Predicated region
    $region22: #{tpu_custom_call.1} parent=1 // pred_check
      _
    $region23: #{tpu_custom_call.1} parent=1 // pred_check_branch
      %169 = sbr.rel (0) target = $region25
    $region24: #{tpu_custom_call.1} parent=1 // pred_region
      %s171 = ssub.s32 128, 128
      %172 = vsyncadd [#allocation4], %s171
      %s174 = sshll.u32 [#allocation7], 4
      %s175 = int_to_ptr.vmem [resolvable:$true] %s174
      %177 = dma.vmem_to_hbm [thread:$0]  %s175, 128, %s3, [#allocation4]
    $region25: #{tpu_custom_call.1} parent=1 // pred_fallthru
      _
    // Predicated region
    $region26: #{tpu_custom_call.1} parent=1 // pred_check
      _
    $region27: #{tpu_custom_call.1} parent=1 // pred_check_branch
      %179 = sbr.rel (0) target = $region29
    $region28: #{tpu_custom_call.1} parent=1 // pred_region
      %180 = dma.done [#allocation4], 128
    $region29: #{tpu_custom_call.1} parent=1 // pred_fallthru
      _
    %181 = vsyncpa [#allocation3], 1
    %182 = vsyncpa [#allocation6], 1
    %183 = vsyncpa [#allocation4], 1

</llo_original>
